<compile_context>
chip_gen: v7x
topology: tpu7x:2x2x1
jax: 0.10.0
libtpu: 0.0.40
codegen_flags: <defaults>
</compile_context>

<pallas_src>
import math

import jax
import jax.numpy as jnp
from jax.experimental import pallas as pl
from jax.experimental.pallas import tpu as pltpu

_BIG = 1e30  # sentinel instead of +/-inf


def _round_up(x, m):
    return ((x + m - 1) // m) * m


def triplet_loss(inputs, targets, *, margin=0.3, block_m=256, block_n=512):
    """Batch-hard triplet loss.  inputs: (n, d) float, targets: (n,) int labels."""
    n, d = inputs.shape
    assert targets.shape == (n,)
    assert block_m % 128 == 0 and block_n % 128 == 0

    # Keep bf16 on the native MXU path; everything else runs in f32.
    if inputs.dtype not in (jnp.bfloat16, jnp.float32):
        inputs = inputs.astype(jnp.float32)

    npb = _round_up(n, 128)
    tm = min(block_m, npb)
    tn = min(block_n, npb)
    n_pad = _round_up(n, tm * tn // math.gcd(tm, tn))

    x_pad = jnp.pad(inputs, ((0, n_pad - n), (0, 0)))
    t_pad = jnp.pad(targets.astype(jnp.int32), (0, n_pad - n))
    xf = x_pad.astype(jnp.float32)
    sq = jnp.sum(xf * xf, axis=1)            # (n_pad,) squared norms (cheap, O(n*d))

    sq_row = sq[None, :]                     # (1, n_pad)  lane-dense, row side
    sq_col = sq[:, None]                     # (n_pad, 1)  sublane,   column side
    t_row = t_pad[None, :]                   # (1, n_pad)
    t_col = t_pad[:, None]                   # (n_pad, 1)

    n_row_tiles = n_pad // tm
    n_col_tiles = n_pad // tn
    margin_f = float(margin)

    def kernel(xr_ref, xc_ref, sqr_ref, sqc_ref, tr_ref, tc_ref,
               hinge_ref, run_max, run_min):
        i = pl.program_id(0)
        k = pl.program_id(1)

        # (TN, TM) Gram tile on the MXU, contracting the feature dim of both
        # tiles -> no x / x.T transpose anywhere.
        gram_t = jax.lax.dot_general(
            xc_ref[...], xr_ref[...],
            dimension_numbers=(((1,), (1,)), ((), ())),
            preferred_element_type=jnp.float32)

        # Squared distance minus the per-row constant ||x_row||^2
        # (added back only in the epilogue, before the sqrt).
        s = sqc_ref[...] - 2.0 * gram_t                      # (TN, TM) f32

        same = tc_ref[...] == tr_ref[...]                    # (TN, TM) bool
        col_ok = (k * tn + jax.lax.broadcasted_iota(jnp.int32, (tn, 1), 0)) < n
        pos_cand = jnp.where(same & col_ok, s, -_BIG)
        neg_cand = jnp.where(jnp.logical_and(jnp.logical_not(same), col_ok), s, _BIG)

        @pl.when(k == 0)
        def _init():
            run_max[...] = jnp.full((tn, tm), -_BIG, jnp.float32)
            run_min[...] = jnp.full((tn, tm), _BIG, jnp.float32)

        # Elementwise running max/min across column tiles (VPU work).
        run_max[...] = jnp.maximum(run_max[...], pos_cand)
        run_min[...] = jnp.minimum(run_min[...], neg_cand)

        @pl.when(k == pl.num_programs(1) - 1)
        def _epilogue():
            sqr = sqr_ref[...]                               # (1, TM)
            ap2 = jnp.max(run_max[...], axis=0, keepdims=True) + sqr
            an2 = jnp.min(run_min[...], axis=0, keepdims=True) + sqr
            dist_ap = jnp.sqrt(jnp.maximum(ap2, 1e-12))      # only 2*TM sqrts
            dist_an = jnp.sqrt(jnp.maximum(an2, 1e-12))
            hinge = jnp.maximum(dist_ap - dist_an + margin_f, 0.0)
            row_ok = (i * tm + jax.lax.broadcasted_iota(jnp.int32, (1, tm), 1)) < n
            hinge_ref[...] = jnp.where(row_ok, hinge, 0.0)

    cost = pl.CostEstimate(
        flops=2 * n_pad * n_pad * d + 8 * n_pad * n_pad,
        transcendentals=2 * n_pad,
        bytes_accessed=(x_pad.size * x_pad.dtype.itemsize * (1 + n_row_tiles)
                        + 16 * n_pad * (1 + n_row_tiles) + 4 * n_pad))

    hinge_rows = pl.pallas_call(
        kernel,
        out_shape=jax.ShapeDtypeStruct((1, n_pad), jnp.float32),
        grid_spec=pltpu.PrefetchScalarGridSpec(
            num_scalar_prefetch=0,
            grid=(n_row_tiles, n_col_tiles),          # reduction axis last
            in_specs=[
                pl.BlockSpec((tm, d), lambda i, k: (i, 0)),   # x, row tile
                pl.BlockSpec((tn, d), lambda i, k: (k, 0)),   # x, column tile
                pl.BlockSpec((1, tm), lambda i, k: (0, i)),   # ||x||^2, row side
                pl.BlockSpec((tn, 1), lambda i, k: (k, 0)),   # ||x||^2, col side
                pl.BlockSpec((1, tm), lambda i, k: (0, i)),   # labels, row side
                pl.BlockSpec((tn, 1), lambda i, k: (k, 0)),   # labels, col side
            ],
            out_specs=pl.BlockSpec((1, tm), lambda i, k: (0, i)),  # lane-dense
            scratch_shapes=[pltpu.VMEM((tn, tm), jnp.float32),
                            pltpu.VMEM((tn, tm), jnp.float32)],
        ),
        compiler_params=pltpu.CompilerParams(
            dimension_semantics=("parallel", "arbitrary"),
            vmem_limit_bytes=64 * 1024 * 1024),
        cost_estimate=cost,
    )(x_pad, x_pad, sq_row, sq_col, t_row, t_col)

    return jnp.sum(hinge_rows) / n


def _reference_loss(inputs, targets, margin=0.3):
    # Pure-JAX reference mirroring the PyTorch forward (debug prints omitted).
    inputs = inputs.astype(jnp.float32)
    sq = jnp.sum(inputs ** 2, axis=1, keepdims=True)
    dist2 = sq + sq.T - 2.0 * inputs @ inputs.T
    dist = jnp.sqrt(jnp.maximum(dist2, 1e-12))
    mask = targets[:, None] == targets[None, :]
    dist_ap = jnp.max(jnp.where(mask, dist, -jnp.inf), axis=1)
    dist_an = jnp.min(jnp.where(mask, jnp.inf, dist), axis=1)
    return jnp.mean(jnp.maximum(dist_ap - dist_an + margin, 0.0))


if __name__ == "__main__":
    key = jax.random.PRNGKey(0)
    k1, k2, k3 = jax.random.split(key, 3)

    # Case 1: small toy batch (single tile after padding to 128).
    n1, d1 = 8, 32
    x1 = jax.random.normal(k1, (n1, d1), dtype=jnp.float32)
    t1 = jnp.array([0, 0, 0, 0, 1, 1, 1, 1], dtype=jnp.int32)
    loss1 = jax.block_until_ready(triplet_loss(x1, t1))
    ref1 = _reference_loss(x1, t1)
    assert jnp.allclose(loss1, ref1, atol=1e-4, rtol=1e-4), (loss1, ref1)

    # Case 2: exercises the tiled grid (2x2 tiles), padding masks and the
    # running max/min accumulators across column tiles.
    n2, d2 = 200, 64
    x2 = jax.random.normal(k2, (n2, d2), dtype=jnp.float32)
    t2 = jax.random.randint(k3, (n2,), 0, 4, dtype=jnp.int32)
    loss2 = jax.block_until_ready(triplet_loss(x2, t2, block_m=128, block_n=128))
    ref2 = _reference_loss(x2, t2)
    assert jnp.allclose(loss2, ref2, atol=1e-4, rtol=1e-4), (loss2, ref2)

    print("KERNEL_OK")
</pallas_src>

<mosaic_0001>
module attributes {stable_mosaic.version = 11 : i64} {
  func.func @kernel(%arg0: i32, %arg1: i32, %arg2: memref<128x32xf32, #tpu.memory_space<vmem>>, %arg3: memref<128x32xf32, #tpu.memory_space<vmem>>, %arg4: memref<1x128xf32, #tpu.memory_space<vmem>>, %arg5: memref<128x1xf32, #tpu.memory_space<vmem>>, %arg6: memref<1x128xi32, #tpu.memory_space<vmem>>, %arg7: memref<128x1xi32, #tpu.memory_space<vmem>>, %arg8: memref<1x128xf32, #tpu.memory_space<vmem>>, %arg9: memref<128x128xf32, #tpu.memory_space<vmem>>, %arg10: memref<128x128xf32, #tpu.memory_space<vmem>>) attributes {dimension_semantics = [#tpu.dimension_semantics<parallel>, #tpu.dimension_semantics<arbitrary>], iteration_bounds = array<i64: 1, 1>, scalar_prefetch = 0 : i64, scratch_operands = 2 : i64, tpu.core_type = #tpu.core_type<tc>, window_params = [{transform_indices = @transform_0, window_bounds = array<i64: 128, 32>}, {transform_indices = @transform_1, window_bounds = array<i64: 128, 32>}, {transform_indices = @transform_2, window_bounds = array<i64: 1, 128>}, {transform_indices = @transform_3, window_bounds = array<i64: 128, 1>}, {transform_indices = @transform_4, window_bounds = array<i64: 1, 128>}, {transform_indices = @transform_5, window_bounds = array<i64: 128, 1>}, {transform_indices = @transform_6, window_bounds = array<i64: 1, 128>}]} {
    %c0 = arith.constant 0 : index
    %c0_0 = arith.constant 0 : index
    %0 = vector.load %arg3[%c0, %c0_0] : memref<128x32xf32, #tpu.memory_space<vmem>>, vector<128x32xf32>
    %c0_1 = arith.constant 0 : index
    %c0_2 = arith.constant 0 : index
    %1 = vector.load %arg2[%c0_1, %c0_2] : memref<128x32xf32, #tpu.memory_space<vmem>>, vector<128x32xf32>
    %cst = arith.constant dense<0.000000e+00> : vector<128x128xf32>
    %2 = tpu.matmul %0, %1, %cst {dimension_numbers = #tpu.dot_dimension_numbers<[1], [1], [0], [0], [0, 0, 1, 0], [], []>} : vector<128x32xf32>, vector<128x32xf32>, vector<128x128xf32> -> vector<128x128xf32>
    %c0_3 = arith.constant 0 : index
    %c0_4 = arith.constant 0 : index
    %3 = vector.load %arg5[%c0_3, %c0_4] : memref<128x1xf32, #tpu.memory_space<vmem>>, vector<128x1xf32>
    %cst_5 = arith.constant 2.000000e+00 : f32
    %4 = vector.broadcast %cst_5 : f32 to vector<128x128xf32>
    %5 = arith.mulf %4, %2 : vector<128x128xf32>
    %6 = vector.broadcast %3 : vector<128x1xf32> to vector<128x128xf32>
    %7 = arith.subf %6, %5 : vector<128x128xf32>
    %c0_6 = arith.constant 0 : index
    %c0_7 = arith.constant 0 : index
    %8 = vector.load %arg7[%c0_6, %c0_7] : memref<128x1xi32, #tpu.memory_space<vmem>>, vector<128x1xi32>
    %c0_8 = arith.constant 0 : index
    %c0_9 = arith.constant 0 : index
    %9 = vector.load %arg6[%c0_8, %c0_9] : memref<1x128xi32, #tpu.memory_space<vmem>>, vector<1x128xi32>
    %10 = vector.broadcast %8 : vector<128x1xi32> to vector<128x128xi32>
    %11 = vector.broadcast %9 : vector<1x128xi32> to vector<128x128xi32>
    %12 = arith.cmpi eq, %10, %11 : vector<128x128xi32>
    %c128_i32 = arith.constant 128 : i32
    %13 = arith.muli %arg1, %c128_i32 : i32
    %14 = tpu.iota {dimensions = array<i32: 0>} : vector<128x1xi32>
    %15 = vector.broadcast %13 : i32 to vector<128x1xi32>
    %16 = arith.addi %15, %14 : vector<128x1xi32>
    %c8_i32 = arith.constant 8 : i32
    %17 = vector.broadcast %c8_i32 : i32 to vector<128x1xi32>
    %18 = arith.cmpi slt, %16, %17 : vector<128x1xi32>
    %19 = vector.broadcast %18 : vector<128x1xi1> to vector<128x128xi1>
    %20 = arith.andi %12, %19 : vector<128x128xi1>
    %cst_10 = arith.constant -1.000000e+30 : f32
    %21 = vector.broadcast %cst_10 : f32 to vector<128x128xf32>
    %22 = arith.select %20, %7, %21 : vector<128x128xi1>, vector<128x128xf32>
    %cst_11 = arith.constant dense<true> : vector<128x128xi1>
    %23 = arith.xori %12, %cst_11 : vector<128x128xi1>
    %24 = vector.broadcast %18 : vector<128x1xi1> to vector<128x128xi1>
    %25 = arith.andi %23, %24 : vector<128x128xi1>
    %cst_12 = arith.constant 1.000000e+30 : f32
    %26 = vector.broadcast %cst_12 : f32 to vector<128x128xf32>
    %27 = arith.select %25, %7, %26 : vector<128x128xi1>, vector<128x128xf32>
    %c0_i32 = arith.constant 0 : i32
    %28 = arith.cmpi eq, %arg1, %c0_i32 : i32
    %29 = arith.extui %28 : i1 to i32
    %c0_i32_13 = arith.constant 0 : i32
    %30 = arith.cmpi ne, %29, %c0_i32_13 : i32
    scf.if %30 {
      %cst_24 = arith.constant -1.000000e+30 : f32
      %40 = vector.broadcast %cst_24 : f32 to vector<128x128xf32>
      %c0_25 = arith.constant 0 : index
      %c0_26 = arith.constant 0 : index
      %41 = vector.load %arg9[%c0_25, %c0_26] : memref<128x128xf32, #tpu.memory_space<vmem>>, vector<128x128xf32>
      tpu.vector_store %arg9[%c0_25, %c0_26], %40 {strides = array<i32>} : memref<128x128xf32, #tpu.memory_space<vmem>>, vector<128x128xf32>,
      %cst_27 = arith.constant 1.000000e+30 : f32
      %42 = vector.broadcast %cst_27 : f32 to vector<128x128xf32>
      %c0_28 = arith.constant 0 : index
      %c0_29 = arith.constant 0 : index
      %43 = vector.load %arg10[%c0_28, %c0_29] : memref<128x128xf32, #tpu.memory_space<vmem>>, vector<128x128xf32>
      tpu.vector_store %arg10[%c0_28, %c0_29], %42 {strides = array<i32>} : memref<128x128xf32, #tpu.memory_space<vmem>>, vector<128x128xf32>,
    } else {
    }
    %c0_14 = arith.constant 0 : index
    %c0_15 = arith.constant 0 : index
    %31 = vector.load %arg9[%c0_14, %c0_15] : memref<128x128xf32, #tpu.memory_space<vmem>>, vector<128x128xf32>
    %32 = arith.maximumf %31, %22 : vector<128x128xf32>
    %c0_16 = arith.constant 0 : index
    %c0_17 = arith.constant 0 : index
    %33 = vector.load %arg9[%c0_16, %c0_17] : memref<128x128xf32, #tpu.memory_space<vmem>>, vector<128x128xf32>
    tpu.vector_store %arg9[%c0_16, %c0_17], %32 {strides = array<i32>} : memref<128x128xf32, #tpu.memory_space<vmem>>, vector<128x128xf32>,
    %c0_18 = arith.constant 0 : index
    %c0_19 = arith.constant 0 : index
    %34 = vector.load %arg10[%c0_18, %c0_19] : memref<128x128xf32, #tpu.memory_space<vmem>>, vector<128x128xf32>
    %35 = arith.minimumf %34, %27 : vector<128x128xf32>
    %c0_20 = arith.constant 0 : index
    %c0_21 = arith.constant 0 : index
    %36 = vector.load %arg10[%c0_20, %c0_21] : memref<128x128xf32, #tpu.memory_space<vmem>>, vector<128x128xf32>
    tpu.vector_store %arg10[%c0_20, %c0_21], %35 {strides = array<i32>} : memref<128x128xf32, #tpu.memory_space<vmem>>, vector<128x128xf32>,
    %c0_i32_22 = arith.constant 0 : i32
    %37 = arith.cmpi eq, %arg1, %c0_i32_22 : i32
    %38 = arith.extui %37 : i1 to i32
    %c0_i32_23 = arith.constant 0 : i32
    %39 = arith.cmpi ne, %38, %c0_i32_23 : i32
    scf.if %39 {
      %c0_24 = arith.constant 0 : index
      %c0_25 = arith.constant 0 : index
      %40 = vector.load %arg4[%c0_24, %c0_25] : memref<1x128xf32, #tpu.memory_space<vmem>>, vector<1x128xf32>
      %c0_26 = arith.constant 0 : index
      %c0_27 = arith.constant 0 : index
      %41 = vector.load %arg9[%c0_26, %c0_27] : memref<128x128xf32, #tpu.memory_space<vmem>>, vector<128x128xf32>
      %cst_28 = arith.constant dense<0xFF800000> : vector<128xf32>
      %42 = vector.multi_reduction <maximumf>, %41, %cst_28 [0] : vector<128x128xf32> to vector<128xf32>
      %43 = vector.shape_cast %42 : vector<128xf32> to vector<1x128xf32>
      %44 = arith.addf %43, %40 : vector<1x128xf32>
      %c0_29 = arith.constant 0 : index
      %c0_30 = arith.constant 0 : index
      %45 = vector.load %arg10[%c0_29, %c0_30] : memref<128x128xf32, #tpu.memory_space<vmem>>, vector<128x128xf32>
      %cst_31 = arith.constant dense<0x7F800000> : vector<128xf32>
      %46 = vector.multi_reduction <minimumf>, %45, %cst_31 [0] : vector<128x128xf32> to vector<128xf32>
      %47 = vector.shape_cast %46 : vector<128xf32> to vector<1x128xf32>
      %48 = arith.addf %47, %40 : vector<1x128xf32>
      %cst_32 = arith.constant 9.99999996E-13 : f32
      %49 = vector.broadcast %cst_32 : f32 to vector<1x128xf32>
      %50 = arith.maximumf %44, %49 : vector<1x128xf32>
      %51 = math.sqrt %50 : vector<1x128xf32>
      %cst_33 = arith.constant 9.99999996E-13 : f32
      %52 = vector.broadcast %cst_33 : f32 to vector<1x128xf32>
      %53 = arith.maximumf %48, %52 : vector<1x128xf32>
      %54 = math.sqrt %53 : vector<1x128xf32>
      %55 = arith.subf %51, %54 : vector<1x128xf32>
      %cst_34 = arith.constant 3.000000e-01 : f32
      %56 = vector.broadcast %cst_34 : f32 to vector<1x128xf32>
      %57 = arith.addf %55, %56 : vector<1x128xf32>
      %cst_35 = arith.constant 0.000000e+00 : f32
      %58 = vector.broadcast %cst_35 : f32 to vector<1x128xf32>
      %59 = arith.maximumf %57, %58 : vector<1x128xf32>
      %c128_i32_36 = arith.constant 128 : i32
      %60 = arith.muli %arg0, %c128_i32_36 : i32
      %61 = tpu.iota {dimensions = array<i32: 1>} : vector<1x128xi32>
      %62 = vector.broadcast %60 : i32 to vector<1x128xi32>
      %63 = arith.addi %62, %61 : vector<1x128xi32>
      %c8_i32_37 = arith.constant 8 : i32
      %64 = vector.broadcast %c8_i32_37 : i32 to vector<1x128xi32>
      %65 = arith.cmpi slt, %63, %64 : vector<1x128xi32>
      %cst_38 = arith.constant 0.000000e+00 : f32
      %66 = vector.broadcast %cst_38 : f32 to vector<1x128xf32>
      %67 = arith.select %65, %59, %66 : vector<1x128xi1>, vector<1x128xf32>
      %c0_39 = arith.constant 0 : index
      %c0_40 = arith.constant 0 : index
      %68 = vector.load %arg8[%c0_39, %c0_40] : memref<1x128xf32, #tpu.memory_space<vmem>>, vector<1x128xf32>
      tpu.vector_store %arg8[%c0_39, %c0_40], %67 {strides = array<i32>} : memref<1x128xf32, #tpu.memory_space<vmem>>, vector<1x128xf32>,
    } else {
    }
    return
  }
  func.func @transform_0(%arg0: i32, %arg1: i32) -> (i32, i32) {
    %c0_i32 = arith.constant 0 : i32
    %c0_i32_0 = arith.constant 0 : i32
    return %arg0, %c0_i32 : i32, i32
  }
  func.func @transform_1(%arg0: i32, %arg1: i32) -> (i32, i32) {
    %c0_i32 = arith.constant 0 : i32
    %c0_i32_0 = arith.constant 0 : i32
    return %arg1, %c0_i32 : i32, i32
  }
  func.func @transform_2(%arg0: i32, %arg1: i32) -> (i32, i32) {
    %c0_i32 = arith.constant 0 : i32
    %c0_i32_0 = arith.constant 0 : i32
    return %c0_i32, %arg0 : i32, i32
  }
  func.func @transform_3(%arg0: i32, %arg1: i32) -> (i32, i32) {
    %c0_i32 = arith.constant 0 : i32
    %c0_i32_0 = arith.constant 0 : i32
    return %arg1, %c0_i32 : i32, i32
  }
  func.func @transform_4(%arg0: i32, %arg1: i32) -> (i32, i32) {
    %c0_i32 = arith.constant 0 : i32
    %c0_i32_0 = arith.constant 0 : i32
    return %c0_i32, %arg0 : i32, i32
  }
  func.func @transform_5(%arg0: i32, %arg1: i32) -> (i32, i32) {
    %c0_i32 = arith.constant 0 : i32
    %c0_i32_0 = arith.constant 0 : i32
    return %arg1, %c0_i32 : i32, i32
  }
  func.func @transform_6(%arg0: i32, %arg1: i32) -> (i32, i32) {
    %c0_i32 = arith.constant 0 : i32
    %c0_i32_0 = arith.constant 0 : i32
    return %c0_i32, %arg0 : i32, i32
  }
}

</mosaic_0001>

<llo_original>
// kernel: tpu_custom_call.1
$region0: #{tpu_custom_call.1}
  #allocation0 [shape = 'u32[]', space=smem, size = 0x4, offset = 0x4, fixed_abs, tag = 'smem constant byte address 0x4 - core index']
  #allocation1 [shape = 'u32[144,128]{1,0:T(1,128)}', space=vmem, size = 0x12000, scoped, tag = 'internal scratch']
  #allocation2 [shape = 'f32[128,128]{1,0:T(8,128)}', space=vmem, size = 0x10000, scoped, tag = 'scratch operand']
  #allocation3 [shape = 'f32[128,128]{1,0:T(8,128)}', space=vmem, size = 0x10000, scoped, tag = 'scratch operand']
  %s0 = inlined_call_operand.hbm [shape: f32[128,32], index: 0, kind: input, shape index: {}]
  %s1 = inlined_call_operand.hbm [shape: f32[128,32], index: 1, kind: input, shape index: {}]
  %s2 = inlined_call_operand.hbm [shape: f32[1,128], index: 2, kind: input, shape index: {}]
  %s3 = inlined_call_operand.hbm [shape: f32[128,1], index: 3, kind: input, shape index: {}]
  %s4 = inlined_call_operand.hbm [shape: s32[1,128], index: 4, kind: input, shape index: {}]
  %s5 = inlined_call_operand.hbm [shape: s32[128,1], index: 5, kind: input, shape index: {}]
  %s6 = inlined_call_operand.hbm [shape: f32[1,128], index: 6, kind: output, shape index: {}]
  %s7 = sld [smem:[#allocation0]]
  $region66: #{tpu_custom_call.1} parent=0
    _
  %s9 = ssub.s32 1, %s7
  %s10 = scalar_select 0, %s9, %s7
  $region1: #{tpu_custom_call.1} parent=0
    #allocation4 [shape = 'u8[65536]{0}', space=vmem, size = 0x10000, scoped, tag = 'input window, operand 0, single buffered']
    #allocation5 [shape = 's32[1]{0}', space=sflag, size = 0x4, scoped, tag = 'scoped memory for tpu_custom_call.1']
    #allocation6 [shape = 's32[1]{0}', space=sflag, size = 0x4, scoped, tag = 'scoped memory for tpu_custom_call.1']
    #allocation7 [shape = 'u8[65536]{0}', space=vmem, size = 0x10000, scoped, tag = 'input window, operand 1, single buffered']
    #allocation8 [shape = 's32[1]{0}', space=sflag, size = 0x4, scoped, tag = 'scoped memory for tpu_custom_call.1']
    #allocation9 [shape = 'u8[512]{0}', space=vmem, size = 0x400, scoped, tag = 'input window, operand 2, single buffered']
    #allocation10 [shape = 'u8[65536]{0}', space=vmem, size = 0x10000, scoped, tag = 'input window, operand 3, single buffered']
    #allocation11 [shape = 's32[1]{0}', space=sflag, size = 0x4, scoped, tag = 'scoped memory for tpu_custom_call.1']
    #allocation12 [shape = 'u8[512]{0}', space=vmem, size = 0x400, scoped, tag = 'input window, operand 4, single buffered']
    #allocation13 [shape = 'u8[65536]{0}', space=vmem, size = 0x10000, scoped, tag = 'input window, operand 5, single buffered']
    #allocation14 [shape = 's32[1]{0}', space=sflag, size = 0x4, scoped, tag = 'scoped memory for tpu_custom_call.1']
    #allocation15 [shape = 'u8[512]{0}', space=vmem, size = 0x400, scoped, tag = 'output window, operand 0, single buffered']
    %11 = vsyncpa [#allocation5], 0
    %12 = vsyncpa [#allocation8], 0
    %13 = vsyncpa [#allocation11], 0
    %14 = vsyncpa [#allocation14], 0
    %15 = vsyncpa [#allocation6], 0
    // Predicated region
    $region2: #{tpu_custom_call.1} parent=1 // pred_check
      _
    $region3: #{tpu_custom_call.1} parent=1 // pred_check_branch
      %17 = sbr.rel (0) target = $region5
    $region4: #{tpu_custom_call.1} parent=1 // pred_region
      %s19 = ssub.s32 2048, 2048
      %20 = vsyncadd [#allocation5], %s19
      %s21 = sshll.u32 [#allocation4], 4
      %s22 = int_to_ptr.vmem [resolvable:$true] %s21
      %27 = dma.hbm_to_vmem [thread:$0]  %s0, 2048, %s22, [#allocation5], 128, 128, 8
    $region5: #{tpu_custom_call.1} parent=1 // pred_fallthru
      _
    // Predicated region
    $region6: #{tpu_custom_call.1} parent=1 // pred_check
      _
    $region7: #{tpu_custom_call.1} parent=1 // pred_check_branch
      %29 = sbr.rel (0) target = $region9
    $region8: #{tpu_custom_call.1} parent=1 // pred_region
      %s31 = ssub.s32 2048, 2048
      %32 = vsyncadd [#allocation8], %s31
      %s33 = sshll.u32 [#allocation7], 4
      %s34 = int_to_ptr.vmem [resolvable:$true] %s33
      %39 = dma.hbm_to_vmem [thread:$0]  %s1, 2048, %s34, [#allocation8], 128, 128, 8
    $region9: #{tpu_custom_call.1} parent=1 // pred_fallthru
      _
    // Predicated region
    $region10: #{tpu_custom_call.1} parent=1 // pred_check
      _
    $region11: #{tpu_custom_call.1} parent=1 // pred_check_branch
      %41 = sbr.rel (0) target = $region13
    $region12: #{tpu_custom_call.1} parent=1 // pred_region
      %s43 = ssub.s32 16, 16
      %44 = vsyncadd [#allocation8], %s43
      %s46 = sshll.u32 [#allocation9], 4
      %s47 = int_to_ptr.vmem [resolvable:$true] %s46
      %49 = dma.hbm_to_vmem [thread:$0]  %s2, 16, %s47, [#allocation8]
    $region13: #{tpu_custom_call.1} parent=1 // pred_fallthru
      _
    // Predicated region
    $region14: #{tpu_custom_call.1} parent=1 // pred_check
      _
    $region15: #{tpu_custom_call.1} parent=1 // pred_check_branch
      %51 = sbr.rel (0) target = $region17
    $region16: #{tpu_custom_call.1} parent=1 // pred_region
      %s53 = ssub.s32 2048, 2048
      %54 = vsyncadd [#allocation11], %s53
      %s55 = sshll.u32 [#allocation10], 4
      %s56 = int_to_ptr.vmem [resolvable:$true] %s55
      %61 = dma.hbm_to_vmem [thread:$0]  %s3, 2048, %s56, [#allocation11], 128, 128, 8
    $region17: #{tpu_custom_call.1} parent=1 // pred_fallthru
      _
    // Predicated region
    $region18: #{tpu_custom_call.1} parent=1 // pred_check
      _
    $region19: #{tpu_custom_call.1} parent=1 // pred_check_branch
      %63 = sbr.rel (0) target = $region21
    $region20: #{tpu_custom_call.1} parent=1 // pred_region
      %s65 = ssub.s32 16, 16
      %66 = vsyncadd [#allocation11], %s65
      %s68 = sshll.u32 [#allocation12], 4
      %s69 = int_to_ptr.vmem [resolvable:$true] %s68
      %71 = dma.hbm_to_vmem [thread:$0]  %s4, 16, %s69, [#allocation11]
    $region21: #{tpu_custom_call.1} parent=1 // pred_fallthru
      _
    // Predicated region
    $region22: #{tpu_custom_call.1} parent=1 // pred_check
      _
    $region23: #{tpu_custom_call.1} parent=1 // pred_check_branch
      %73 = sbr.rel (0) target = $region25
    $region24: #{tpu_custom_call.1} parent=1 // pred_region
      %s75 = ssub.s32 2048, 2048
      %76 = vsyncadd [#allocation14], %s75
      %s77 = sshll.u32 [#allocation13], 4
      %s78 = int_to_ptr.vmem [resolvable:$true] %s77
      %83 = dma.hbm_to_vmem [thread:$0]  %s5, 2048, %s78, [#allocation14], 128, 128, 8
    $region25: #{tpu_custom_call.1} parent=1 // pred_fallthru
      _
    // Predicated region
    $region26: #{tpu_custom_call.1} parent=1 // pred_check
      _
    $region27: #{tpu_custom_call.1} parent=1 // pred_check_branch
      %85 = sbr.rel (0) target = $region29
    $region28: #{tpu_custom_call.1} parent=1 // pred_region
      %86 = dma.done [#allocation5], 2048
    $region29: #{tpu_custom_call.1} parent=1 // pred_fallthru
      _
    // Predicated region
    $region30: #{tpu_custom_call.1} parent=1 // pred_check
      _
    $region31: #{tpu_custom_call.1} parent=1 // pred_check_branch
      %88 = sbr.rel (0) target = $region33
    $region32: #{tpu_custom_call.1} parent=1 // pred_region
      %89 = dma.done [#allocation8], 2048
    $region33: #{tpu_custom_call.1} parent=1 // pred_fallthru
      _
    // Predicated region
    $region34: #{tpu_custom_call.1} parent=1 // pred_check
      _
    $region35: #{tpu_custom_call.1} parent=1 // pred_check_branch
      %91 = sbr.rel (0) target = $region37
    $region36: #{tpu_custom_call.1} parent=1 // pred_region
      %92 = dma.done [#allocation8], 16
    $region37: #{tpu_custom_call.1} parent=1 // pred_fallthru
      _
    // Predicated region
    $region38: #{tpu_custom_call.1} parent=1 // pred_check
      _
    $region39: #{tpu_custom_call.1} parent=1 // pred_check_branch
      %94 = sbr.rel (0) target = $region41
    $region40: #{tpu_custom_call.1} parent=1 // pred_region
      %95 = dma.done [#allocation11], 2048
    $region41: #{tpu_custom_call.1} parent=1 // pred_fallthru
      _
    // Predicated region
    $region42: #{tpu_custom_call.1} parent=1 // pred_check
      _
    $region43: #{tpu_custom_call.1} parent=1 // pred_check_branch
      %97 = sbr.rel (0) target = $region45
    $region44: #{tpu_custom_call.1} parent=1 // pred_region
      %98 = dma.done [#allocation11], 16
    $region45: #{tpu_custom_call.1} parent=1 // pred_fallthru
      _
    // Predicated region
    $region46: #{tpu_custom_call.1} parent=1 // pred_check
      _
    $region47: #{tpu_custom_call.1} parent=1 // pred_check_branch
      %100 = sbr.rel (0) target = $region49
    $region48: #{tpu_custom_call.1} parent=1 // pred_region
      %101 = dma.done [#allocation14], 2048
    $region49: #{tpu_custom_call.1} parent=1 // pred_fallthru
      _
    %v102 = vld [vmem:[#allocation7] sm:$0xff]
    %v103 = vld [vmem:[#allocation7 + $0x8] sm:$0xff]
    %v104 = vld [vmem:[#allocation7 + $0x10] sm:$0xff]
    %v105 = vld [vmem:[#allocation7 + $0x18] sm:$0xff]
    %v106 = vld [vmem:[#allocation7 + $0x20] sm:$0xff]
    %v107 = vld [vmem:[#allocation7 + $0x28] sm:$0xff]
    %v108 = vld [vmem:[#allocation7 + $0x30] sm:$0xff]
    %v109 = vld [vmem:[#allocation7 + $0x38] sm:$0xff]
    %v110 = vld [vmem:[#allocation7 + $0x40] sm:$0xff]
    %v111 = vld [vmem:[#allocation7 + $0x48] sm:$0xff]
    %v112 = vld [vmem:[#allocation7 + $0x50] sm:$0xff]
    %v113 = vld [vmem:[#allocation7 + $0x58] sm:$0xff]
    %v114 = vld [vmem:[#allocation7 + $0x60] sm:$0xff]
    %v115 = vld [vmem:[#allocation7 + $0x68] sm:$0xff]
    %v116 = vld [vmem:[#allocation7 + $0x70] sm:$0xff]
    %v117 = vld [vmem:[#allocation7 + $0x78] sm:$0xff]
    %v118 = vld [vmem:[#allocation4] sm:$0xff]
    %v119 = vld [vmem:[#allocation4 + $0x8] sm:$0xff]
    %v120 = vld [vmem:[#allocation4 + $0x10] sm:$0xff]
    %v121 = vld [vmem:[#allocation4 + $0x18] sm:$0xff]
    %v122 = vld [vmem:[#allocation4 + $0x20] sm:$0xff]
    %v123 = vld [vmem:[#allocation4 + $0x28] sm:$0xff]
    %v124 = vld [vmem:[#allocation4 + $0x30] sm:$0xff]
    %v125 = vld [vmem:[#allocation4 + $0x38] sm:$0xff]
    %v126 = vld [vmem:[#allocation4 + $0x40] sm:$0xff]
    %v127 = vld [vmem:[#allocation4 + $0x48] sm:$0xff]
    %v128 = vld [vmem:[#allocation4 + $0x50] sm:$0xff]
    %v129 = vld [vmem:[#allocation4 + $0x58] sm:$0xff]
    %v130 = vld [vmem:[#allocation4 + $0x60] sm:$0xff]
    %v131 = vld [vmem:[#allocation4 + $0x68] sm:$0xff]
    %v132 = vld [vmem:[#allocation4 + $0x70] sm:$0xff]
    %v133 = vld [vmem:[#allocation4 + $0x78] sm:$0xff]
    %vm134 = vcmask 261120
    %v136 = vsel %vm134, %v102, 0
    %v139 = vsel %vm134, %v103, 0
    %v142 = vsel %vm134, %v104, 0
    %v145 = vsel %vm134, %v105, 0
    %v148 = vsel %vm134, %v106, 0
    %v151 = vsel %vm134, %v107, 0
    %v154 = vsel %vm134, %v108, 0
    %v157 = vsel %vm134, %v109, 0
    %v160 = vsel %vm134, %v110, 0
    %v163 = vsel %vm134, %v111, 0
    %v166 = vsel %vm134, %v112, 0
    %v169 = vsel %vm134, %v113, 0
    %v172 = vsel %vm134, %v114, 0
    %v175 = vsel %vm134, %v115, 0
    %v178 = vsel %vm134, %v116, 0
    %v181 = vsel %vm134, %v117, 0
    %v184 = vsel %vm134, %v118, 0
    %v187 = vsel %vm134, %v119, 0
    %v190 = vsel %vm134, %v120, 0
    %v193 = vsel %vm134, %v121, 0
    %v196 = vsel %vm134, %v122, 0
    %v199 = vsel %vm134, %v123, 0
    %v202 = vsel %vm134, %v124, 0
    %v205 = vsel %vm134, %v125, 0
    %v208 = vsel %vm134, %v126, 0
    %v211 = vsel %vm134, %v127, 0
    %v214 = vsel %vm134, %v128, 0
    %v217 = vsel %vm134, %v129, 0
    %v220 = vsel %vm134, %v130, 0
    %v223 = vsel %vm134, %v131, 0
    %v226 = vsel %vm134, %v132, 0
    %v229 = vsel %vm134, %v133, 0
    %231 = vmatprep.subr.mxu0 0.0
    %232 = vmatpush1.xpose.msra.mxu0 %v184
    %233 = vmatprep.subr.mxu0 0.0
    %234 = vmatpush1.xpose.msra.mxu0 %v187
    %235 = vmatprep.subr.mxu0 0.0
    %236 = vmatpush1.xpose.msra.mxu0 %v190
    %237 = vmatprep.subr.mxu0 0.0
    %238 = vmatpush1.xpose.msra.mxu0 %v193
    %239 = vmatprep.subr.mxu0 0.0
    %240 = vmatpush1.xpose.msra.mxu0 %v196
    %241 = vmatprep.subr.mxu0 0.0
    %242 = vmatpush1.xpose.msra.mxu0 %v199
    %243 = vmatprep.subr.mxu0 0.0
    %244 = vmatpush1.xpose.msra.mxu0 %v202
    %245 = vmatprep.subr.mxu0 0.0
    %246 = vmatpush1.xpose.msra.mxu0 %v205
    %247 = vmatprep.subr.mxu0 0.0
    %248 = vmatpush1.xpose.msra.mxu0 %v208
    %249 = vmatprep.subr.mxu0 0.0
    %250 = vmatpush1.xpose.msra.mxu0 %v211
    %251 = vmatprep.subr.mxu0 0.0
    %252 = vmatpush1.xpose.msra.mxu0 %v214
    %253 = vmatprep.subr.mxu0 0.0
    %254 = vmatpush1.xpose.msra.mxu0 %v217
    %255 = vmatprep.subr.mxu0 0.0
    %256 = vmatpush1.xpose.msra.mxu0 %v220
    %257 = vmatprep.subr.mxu0 0.0
    %258 = vmatpush1.xpose.msra.mxu0 %v223
    %259 = vmatprep.subr.mxu0 0.0
    %260 = vmatpush1.xpose.msra.mxu0 %v226
    %261 = vmatprep.subr.mxu0 0.0
    %262 = vmatpush1.xpose.msra.mxu0 %v229
    %263 = vmatprep.subr.mxu0 0.0
    %264 = vmatpush1.xpose.msra.mxu0 0.0
    %265 = vmatprep.subr.mxu0 0.0
    %266 = vmatpush1.xpose.msra.mxu0 0.0
    %267 = vmatprep.subr.mxu0 0.0
    %268 = vmatpush1.xpose.msra.mxu0 0.0
    %269 = vmatprep.subr.mxu0 0.0
    %270 = vmatpush1.xpose.msra.mxu0 0.0
    %271 = vmatprep.subr.mxu0 0.0
    %272 = vmatpush1.xpose.msra.mxu0 0.0
    %273 = vmatprep.subr.mxu0 0.0
    %274 = vmatpush1.xpose.msra.mxu0 0.0
    %275 = vmatprep.subr.mxu0 0.0
    %276 = vmatpush1.xpose.msra.mxu0 0.0
    %277 = vmatprep.subr.mxu0 0.0
    %278 = vmatpush1.xpose.msra.mxu0 0.0
    %279 = vmatprep.subr.mxu0 0.0
    %280 = vmatpush1.xpose.msra.mxu0 0.0
    %281 = vmatprep.subr.mxu0 0.0
    %282 = vmatpush1.xpose.msra.mxu0 0.0
    %283 = vmatprep.subr.mxu0 0.0
    %284 = vmatpush1.xpose.msra.mxu0 0.0
    %285 = vmatprep.subr.mxu0 0.0
    %286 = vmatpush1.xpose.msra.mxu0 0.0
    %287 = vmatprep.subr.mxu0 0.0
    %288 = vmatpush1.xpose.msra.mxu0 0.0
    %289 = vmatprep.subr.mxu0 0.0
    %290 = vmatpush1.xpose.msra.mxu0 0.0
    %291 = vmatprep.subr.mxu0 0.0
    %292 = vmatpush1.xpose.msra.mxu0 0.0
    %293 = vmatprep.subr.mxu0 0.0
    %294 = vmatpush1.xpose.msra.mxu0 0.0
    %295 = vmatprep.mubr.f32.mxu0 0.0
    %296 = vmatmul.mubr.f32.gmra.mrb[0].mxu0 %v136
    %v297 = vpop.f32.mrb[0].mxu0
    %v298 = vadd.f32 0.0, %v297
    %v299 = vpop.f32.mrb[0].mxu0
    %300 = vmatprep.mubr.f32.mxu0 0.0
    %301 = vmatmul.mubr.f32.gmra.mrb[0].mxu0 %v139
    %v302 = vpop.f32.mrb[0].mxu0
    %v303 = vadd.f32 0.0, %v302
    %v304 = vpop.f32.mrb[0].mxu0
    %305 = vmatprep.mubr.f32.mxu0 0.0
    %306 = vmatmul.mubr.f32.gmra.mrb[0].mxu0 %v142
    %v307 = vpop.f32.mrb[0].mxu0
    %v308 = vadd.f32 0.0, %v307
    %v309 = vpop.f32.mrb[0].mxu0
    %310 = vmatprep.mubr.f32.mxu0 0.0
    %311 = vmatmul.mubr.f32.gmra.mrb[0].mxu0 %v145
    %v312 = vpop.f32.mrb[0].mxu0
    %v313 = vadd.f32 0.0, %v312
    %v314 = vpop.f32.mrb[0].mxu0
    %315 = vmatprep.mubr.f32.mxu0 0.0
    %316 = vmatmul.mubr.f32.gmra.mrb[0].mxu0 %v148
    %v317 = vpop.f32.mrb[0].mxu0
    %v318 = vadd.f32 0.0, %v317
    %v319 = vpop.f32.mrb[0].mxu0
    %320 = vmatprep.mubr.f32.mxu0 0.0
    %321 = vmatmul.mubr.f32.gmra.mrb[0].mxu0 %v151
    %v322 = vpop.f32.mrb[0].mxu0
    %v323 = vadd.f32 0.0, %v322
    %v324 = vpop.f32.mrb[0].mxu0
    %325 = vmatprep.mubr.f32.mxu0 0.0
    %326 = vmatmul.mubr.f32.gmra.mrb[0].mxu0 %v154
    %v327 = vpop.f32.mrb[0].mxu0
    %v328 = vadd.f32 0.0, %v327
    %v329 = vpop.f32.mrb[0].mxu0
    %330 = vmatprep.mubr.f32.mxu0 0.0
    %331 = vmatmul.mubr.f32.gmra.mrb[0].mxu0 %v157
    %v332 = vpop.f32.mrb[0].mxu0
    %v333 = vadd.f32 0.0, %v332
    %v334 = vpop.f32.mrb[0].mxu0
    %335 = vmatprep.mubr.f32.mxu0 0.0
    %336 = vmatmul.mubr.f32.gmra.mrb[0].mxu0 %v160
    %v337 = vpop.f32.mrb[0].mxu0
    %v338 = vadd.f32 0.0, %v337
    %v339 = vpop.f32.mrb[0].mxu0
    %340 = vmatprep.mubr.f32.mxu0 0.0
    %341 = vmatmul.mubr.f32.gmra.mrb[0].mxu0 %v163
    %v342 = vpop.f32.mrb[0].mxu0
    %v343 = vadd.f32 0.0, %v342
    %v344 = vpop.f32.mrb[0].mxu0
    %345 = vmatprep.mubr.f32.mxu0 0.0
    %346 = vmatmul.mubr.f32.gmra.mrb[0].mxu0 %v166
    %v347 = vpop.f32.mrb[0].mxu0
    %v348 = vadd.f32 0.0, %v347
    %v349 = vpop.f32.mrb[0].mxu0
    %350 = vmatprep.mubr.f32.mxu0 0.0
    %351 = vmatmul.mubr.f32.gmra.mrb[0].mxu0 %v169
    %v352 = vpop.f32.mrb[0].mxu0
    %v353 = vadd.f32 0.0, %v352
    %v354 = vpop.f32.mrb[0].mxu0
    %355 = vmatprep.mubr.f32.mxu0 0.0
    %356 = vmatmul.mubr.f32.gmra.mrb[0].mxu0 %v172
    %v357 = vpop.f32.mrb[0].mxu0
    %v358 = vadd.f32 0.0, %v357
    %v359 = vpop.f32.mrb[0].mxu0
    %360 = vmatprep.mubr.f32.mxu0 0.0
    %361 = vmatmul.mubr.f32.gmra.mrb[0].mxu0 %v175
    %v362 = vpop.f32.mrb[0].mxu0
    %v363 = vadd.f32 0.0, %v362
    %v364 = vpop.f32.mrb[0].mxu0
    %365 = vmatprep.mubr.f32.mxu0 0.0
    %366 = vmatmul.mubr.f32.gmra.mrb[0].mxu0 %v178
    %v367 = vpop.f32.mrb[0].mxu0
    %v368 = vadd.f32 0.0, %v367
    %v369 = vpop.f32.mrb[0].mxu0
    %370 = vmatprep.mubr.f32.mxu0 0.0
    %371 = vmatmul.mubr.f32.gmra.mrb[0].mxu0 %v181
    %v372 = vpop.f32.mrb[0].mxu0
    %v373 = vadd.f32 0.0, %v372
    %v374 = vpop.f32.mrb[0].mxu0
    %375 = vdwg.mxu0
    %v376 = vld [vmem:[#allocation10] sm:$0xff]
    %v377 = vld [vmem:[#allocation10 + $0x8] sm:$0xff]
    %v378 = vld [vmem:[#allocation10 + $0x10] sm:$0xff]
    %v379 = vld [vmem:[#allocation10 + $0x18] sm:$0xff]
    %v380 = vld [vmem:[#allocation10 + $0x20] sm:$0xff]
    %v381 = vld [vmem:[#allocation10 + $0x28] sm:$0xff]
    %v382 = vld [vmem:[#allocation10 + $0x30] sm:$0xff]
    %v383 = vld [vmem:[#allocation10 + $0x38] sm:$0xff]
    %v384 = vld [vmem:[#allocation10 + $0x40] sm:$0xff]
    %v385 = vld [vmem:[#allocation10 + $0x48] sm:$0xff]
    %v386 = vld [vmem:[#allocation10 + $0x50] sm:$0xff]
    %v387 = vld [vmem:[#allocation10 + $0x58] sm:$0xff]
    %v388 = vld [vmem:[#allocation10 + $0x60] sm:$0xff]
    %v389 = vld [vmem:[#allocation10 + $0x68] sm:$0xff]
    %v390 = vld [vmem:[#allocation10 + $0x70] sm:$0xff]
    %v391 = vld [vmem:[#allocation10 + $0x78] sm:$0xff]
    %v392 = vmul.f32 %v298, 2.0
    %v393 = vmul.f32 %v303, 2.0
    %v394 = vmul.f32 %v308, 2.0
    %v395 = vmul.f32 %v313, 2.0
    %v396 = vmul.f32 %v318, 2.0
    %v397 = vmul.f32 %v323, 2.0
    %v398 = vmul.f32 %v328, 2.0
    %v399 = vmul.f32 %v333, 2.0
    %v400 = vmul.f32 %v338, 2.0
    %v401 = vmul.f32 %v343, 2.0
    %v402 = vmul.f32 %v348, 2.0
    %v403 = vmul.f32 %v353, 2.0
    %v404 = vmul.f32 %v358, 2.0
    %v405 = vmul.f32 %v363, 2.0
    %v406 = vmul.f32 %v368, 2.0
    %v407 = vmul.f32 %v373, 2.0
    %409 = vset.pattern.permute.xlu0 0
    %410 = vperm.xlu0 %409, %v376
    %v411 = vpop.permute.xlu0 %410
    %414 = vset.pattern.permute.xlu0 0
    %415 = vperm.xlu0 %414, %v377
    %v416 = vpop.permute.xlu0 %415
    %419 = vset.pattern.permute.xlu0 0
    %420 = vperm.xlu0 %419, %v378
    %v421 = vpop.permute.xlu0 %420
    %424 = vset.pattern.permute.xlu0 0
    %425 = vperm.xlu0 %424, %v379
    %v426 = vpop.permute.xlu0 %425
    %429 = vset.pattern.permute.xlu0 0
    %430 = vperm.xlu0 %429, %v380
    %v431 = vpop.permute.xlu0 %430
    %434 = vset.pattern.permute.xlu0 0
    %435 = vperm.xlu0 %434, %v381
    %v436 = vpop.permute.xlu0 %435
    %439 = vset.pattern.permute.xlu0 0
    %440 = vperm.xlu0 %439, %v382
    %v441 = vpop.permute.xlu0 %440
    %444 = vset.pattern.permute.xlu0 0
    %445 = vperm.xlu0 %444, %v383
    %v446 = vpop.permute.xlu0 %445
    %449 = vset.pattern.permute.xlu0 0
    %450 = vperm.xlu0 %449, %v384
    %v451 = vpop.permute.xlu0 %450
    %454 = vset.pattern.permute.xlu0 0
    %455 = vperm.xlu0 %454, %v385
    %v456 = vpop.permute.xlu0 %455
    %459 = vset.pattern.permute.xlu0 0
    %460 = vperm.xlu0 %459, %v386
    %v461 = vpop.permute.xlu0 %460
    %464 = vset.pattern.permute.xlu0 0
    %465 = vperm.xlu0 %464, %v387
    %v466 = vpop.permute.xlu0 %465
    %469 = vset.pattern.permute.xlu0 0
    %470 = vperm.xlu0 %469, %v388
    %v471 = vpop.permute.xlu0 %470
    %474 = vset.pattern.permute.xlu0 0
    %475 = vperm.xlu0 %474, %v389
    %v476 = vpop.permute.xlu0 %475
    %479 = vset.pattern.permute.xlu0 0
    %480 = vperm.xlu0 %479, %v390
    %v481 = vpop.permute.xlu0 %480
    %484 = vset.pattern.permute.xlu0 0
    %485 = vperm.xlu0 %484, %v391
    %v486 = vpop.permute.xlu0 %485
    %v488 = vsub.f32 %v411, %v392
    %v489 = vsub.f32 %v416, %v393
    %v490 = vsub.f32 %v421, %v394
    %v491 = vsub.f32 %v426, %v395
    %v492 = vsub.f32 %v431, %v396
    %v493 = vsub.f32 %v436, %v397
    %v494 = vsub.f32 %v441, %v398
    %v495 = vsub.f32 %v446, %v399
    %v496 = vsub.f32 %v451, %v400
    %v497 = vsub.f32 %v456, %v401
    %v498 = vsub.f32 %v461, %v402
    %v499 = vsub.f32 %v466, %v403
    %v500 = vsub.f32 %v471, %v404
    %v501 = vsub.f32 %v476, %v405
    %v502 = vsub.f32 %v481, %v406
    %v503 = vsub.f32 %v486, %v407
    %v504 = vld [vmem:[#allocation13] sm:$0xff]
    %v505 = vld [vmem:[#allocation13 + $0x8] sm:$0xff]
    %v506 = vld [vmem:[#allocation13 + $0x10] sm:$0xff]
    %v507 = vld [vmem:[#allocation13 + $0x18] sm:$0xff]
    %v508 = vld [vmem:[#allocation13 + $0x20] sm:$0xff]
    %v509 = vld [vmem:[#allocation13 + $0x28] sm:$0xff]
    %v510 = vld [vmem:[#allocation13 + $0x30] sm:$0xff]
    %v511 = vld [vmem:[#allocation13 + $0x38] sm:$0xff]
    %v512 = vld [vmem:[#allocation13 + $0x40] sm:$0xff]
    %v513 = vld [vmem:[#allocation13 + $0x48] sm:$0xff]
    %v514 = vld [vmem:[#allocation13 + $0x50] sm:$0xff]
    %v515 = vld [vmem:[#allocation13 + $0x58] sm:$0xff]
    %v516 = vld [vmem:[#allocation13 + $0x60] sm:$0xff]
    %v517 = vld [vmem:[#allocation13 + $0x68] sm:$0xff]
    %v518 = vld [vmem:[#allocation13 + $0x70] sm:$0xff]
    %v519 = vld [vmem:[#allocation13 + $0x78] sm:$0xff]
    %v520 = vld [vmem:[#allocation12] sm:$0x1]
    %521 = vset.pattern.permute.xlu0 0
    %522 = vperm.xlu0 %521, %v504
    %v523 = vpop.permute.xlu0 %522
    %524 = vset.pattern.permute.xlu0 0
    %525 = vperm.xlu0 %524, %v505
    %v526 = vpop.permute.xlu0 %525
    %527 = vset.pattern.permute.xlu0 0
    %528 = vperm.xlu0 %527, %v506
    %v529 = vpop.permute.xlu0 %528
    %530 = vset.pattern.permute.xlu0 0
    %531 = vperm.xlu0 %530, %v507
    %v532 = vpop.permute.xlu0 %531
    %533 = vset.pattern.permute.xlu0 0
    %534 = vperm.xlu0 %533, %v508
    %v535 = vpop.permute.xlu0 %534
    %536 = vset.pattern.permute.xlu0 0
    %537 = vperm.xlu0 %536, %v509
    %v538 = vpop.permute.xlu0 %537
    %539 = vset.pattern.permute.xlu0 0
    %540 = vperm.xlu0 %539, %v510
    %v541 = vpop.permute.xlu0 %540
    %542 = vset.pattern.permute.xlu0 0
    %543 = vperm.xlu0 %542, %v511
    %v544 = vpop.permute.xlu0 %543
    %545 = vset.pattern.permute.xlu0 0
    %546 = vperm.xlu0 %545, %v512
    %v547 = vpop.permute.xlu0 %546
    %548 = vset.pattern.permute.xlu0 0
    %549 = vperm.xlu0 %548, %v513
    %v550 = vpop.permute.xlu0 %549
    %551 = vset.pattern.permute.xlu0 0
    %552 = vperm.xlu0 %551, %v514
    %v553 = vpop.permute.xlu0 %552
    %554 = vset.pattern.permute.xlu0 0
    %555 = vperm.xlu0 %554, %v515
    %v556 = vpop.permute.xlu0 %555
    %557 = vset.pattern.permute.xlu0 0
    %558 = vperm.xlu0 %557, %v516
    %v559 = vpop.permute.xlu0 %558
    %560 = vset.pattern.permute.xlu0 0
    %561 = vperm.xlu0 %560, %v517
    %v562 = vpop.permute.xlu0 %561
    %563 = vset.pattern.permute.xlu0 0
    %564 = vperm.xlu0 %563, %v518
    %v565 = vpop.permute.xlu0 %564
    %566 = vset.pattern.permute.xlu0 0
    %567 = vperm.xlu0 %566, %v519
    %v568 = vpop.permute.xlu0 %567
    %v569 = vlaneseq
    %v570 = vshrl.u32 %v569, 7
    %v571 = vsub.s32 0, %v570
    %v572 = vrot.slane %v520, %v571
    %vm573 = vcmp.eq.s32.totalorder %v523, %v572
    %vm574 = vcmp.eq.s32.totalorder %v526, %v572
    %vm575 = vcmp.eq.s32.totalorder %v529, %v572
    %vm576 = vcmp.eq.s32.totalorder %v532, %v572
    %vm577 = vcmp.eq.s32.totalorder %v535, %v572
    %vm578 = vcmp.eq.s32.totalorder %v538, %v572
    %vm579 = vcmp.eq.s32.totalorder %v541, %v572
    %vm580 = vcmp.eq.s32.totalorder %v544, %v572
    %vm581 = vcmp.eq.s32.totalorder %v547, %v572
    %vm582 = vcmp.eq.s32.totalorder %v550, %v572
    %vm583 = vcmp.eq.s32.totalorder %v553, %v572
    %vm584 = vcmp.eq.s32.totalorder %v556, %v572
    %vm585 = vcmp.eq.s32.totalorder %v559, %v572
    %vm586 = vcmp.eq.s32.totalorder %v562, %v572
    %vm587 = vcmp.eq.s32.totalorder %v565, %v572
    %vm588 = vcmp.eq.s32.totalorder %v568, %v572
    %s589 = smul.u32 0, 128
    %v590 = vlaneseq
    %v591 = vshrl.u32 %v590, 7
    %v592 = vadd.s32 %v591, 8
    %v593 = vadd.s32 %v591, 16
    %v594 = vadd.s32 %v591, 24
    %v595 = vadd.s32 %v591, 32
    %v596 = vadd.s32 %v591, 40
    %v597 = vadd.s32 %v591, 48
    %v598 = vadd.s32 %v591, 56
    %v599 = vadd.s32 %v591, 64
    %v600 = vadd.s32 %v591, 72
    %v601 = vadd.s32 %v591, 80
    %v602 = vadd.s32 %v591, 88
    %v603 = vadd.s32 %v591, 96
    %v604 = vadd.s32 %v591, 104
    %v605 = vadd.s32 %v591, 112
    %v606 = vadd.s32 %v591, 120
    %v607 = vstv %s589
    %v608 = vadd.s32 %v607, %v591
    %v609 = vadd.s32 %v607, %v592
    %v610 = vadd.s32 %v607, %v593
    %v611 = vadd.s32 %v607, %v594
    %v612 = vadd.s32 %v607, %v595
    %v613 = vadd.s32 %v607, %v596
    %v614 = vadd.s32 %v607, %v597
    %v615 = vadd.s32 %v607, %v598
    %v616 = vadd.s32 %v607, %v599
    %v617 = vadd.s32 %v607, %v600
    %v618 = vadd.s32 %v607, %v601
    %v619 = vadd.s32 %v607, %v602
    %v620 = vadd.s32 %v607, %v603
    %v621 = vadd.s32 %v607, %v604
    %v622 = vadd.s32 %v607, %v605
    %v623 = vadd.s32 %v607, %v606
    %vm624 = vcmp.lt.s32.totalorder %v608, 8
    %vm625 = vcmp.lt.s32.totalorder %v609, 8
    %vm626 = vcmp.lt.s32.totalorder %v610, 8
    %vm627 = vcmp.lt.s32.totalorder %v611, 8
    %vm628 = vcmp.lt.s32.totalorder %v612, 8
    %vm629 = vcmp.lt.s32.totalorder %v613, 8
    %vm630 = vcmp.lt.s32.totalorder %v614, 8
    %vm631 = vcmp.lt.s32.totalorder %v615, 8
    %vm632 = vcmp.lt.s32.totalorder %v616, 8
    %vm633 = vcmp.lt.s32.totalorder %v617, 8
    %vm634 = vcmp.lt.s32.totalorder %v618, 8
    %vm635 = vcmp.lt.s32.totalorder %v619, 8
    %vm636 = vcmp.lt.s32.totalorder %v620, 8
    %vm637 = vcmp.lt.s32.totalorder %v621, 8
    %vm638 = vcmp.lt.s32.totalorder %v622, 8
    %vm639 = vcmp.lt.s32.totalorder %v623, 8
    %v640 = vsel %vm624, 1, 0
    %v641 = vsel %vm625, 1, 0
    %v642 = vsel %vm626, 1, 0
    %v643 = vsel %vm627, 1, 0
    %v644 = vsel %vm628, 1, 0
    %v645 = vsel %vm629, 1, 0
    %v646 = vsel %vm630, 1, 0
    %v647 = vsel %vm631, 1, 0
    %v648 = vsel %vm632, 1, 0
    %v649 = vsel %vm633, 1, 0
    %v650 = vsel %vm634, 1, 0
    %v651 = vsel %vm635, 1, 0
    %v652 = vsel %vm636, 1, 0
    %v653 = vsel %vm637, 1, 0
    %v654 = vsel %vm638, 1, 0
    %v655 = vsel %vm639, 1, 0
    %vm656 = vcmp.eq.s32.totalorder %v640, 1
    %vm657 = vcmp.eq.s32.totalorder %v641, 1
    %vm658 = vcmp.eq.s32.totalorder %v642, 1
    %vm659 = vcmp.eq.s32.totalorder %v643, 1
    %vm660 = vcmp.eq.s32.totalorder %v644, 1
    %vm661 = vcmp.eq.s32.totalorder %v645, 1
    %vm662 = vcmp.eq.s32.totalorder %v646, 1
    %vm663 = vcmp.eq.s32.totalorder %v647, 1
    %vm664 = vcmp.eq.s32.totalorder %v648, 1
    %vm665 = vcmp.eq.s32.totalorder %v649, 1
    %vm666 = vcmp.eq.s32.totalorder %v650, 1
    %vm667 = vcmp.eq.s32.totalorder %v651, 1
    %vm668 = vcmp.eq.s32.totalorder %v652, 1
    %vm669 = vcmp.eq.s32.totalorder %v653, 1
    %vm670 = vcmp.eq.s32.totalorder %v654, 1
    %vm671 = vcmp.eq.s32.totalorder %v655, 1
    %vm672 = vmand %vm573, %vm656
    %vm673 = vmand %vm574, %vm657
    %vm674 = vmand %vm575, %vm658
    %vm675 = vmand %vm576, %vm659
    %vm676 = vmand %vm577, %vm660
    %vm677 = vmand %vm578, %vm661
    %vm678 = vmand %vm579, %vm662
    %vm679 = vmand %vm580, %vm663
    %vm680 = vmand %vm581, %vm664
    %vm681 = vmand %vm582, %vm665
    %vm682 = vmand %vm583, %vm666
    %vm683 = vmand %vm584, %vm667
    %vm684 = vmand %vm585, %vm668
    %vm685 = vmand %vm586, %vm669
    %vm686 = vmand %vm587, %vm670
    %vm687 = vmand %vm588, %vm671
    %v688 = vsel %vm672, %v488, -1e+30
    %v689 = vsel %vm673, %v489, -1e+30
    %v690 = vsel %vm674, %v490, -1e+30
    %v691 = vsel %vm675, %v491, -1e+30
    %v692 = vsel %vm676, %v492, -1e+30
    %v693 = vsel %vm677, %v493, -1e+30
    %v694 = vsel %vm678, %v494, -1e+30
    %v695 = vsel %vm679, %v495, -1e+30
    %v696 = vsel %vm680, %v496, -1e+30
    %v697 = vsel %vm681, %v497, -1e+30
    %v698 = vsel %vm682, %v498, -1e+30
    %v699 = vsel %vm683, %v499, -1e+30
    %v700 = vsel %vm684, %v500, -1e+30
    %v701 = vsel %vm685, %v501, -1e+30
    %v702 = vsel %vm686, %v502, -1e+30
    %v703 = vsel %vm687, %v503, -1e+30
    %vm704 = vmxor %vm573, 1
    %vm705 = vmxor %vm574, 1
    %vm706 = vmxor %vm575, 1
    %vm707 = vmxor %vm576, 1
    %vm708 = vmxor %vm577, 1
    %vm709 = vmxor %vm578, 1
    %vm710 = vmxor %vm579, 1
    %vm711 = vmxor %vm580, 1
    %vm712 = vmxor %vm581, 1
    %vm713 = vmxor %vm582, 1
    %vm714 = vmxor %vm583, 1
    %vm715 = vmxor %vm584, 1
    %vm716 = vmxor %vm585, 1
    %vm717 = vmxor %vm586, 1
    %vm718 = vmxor %vm587, 1
    %vm719 = vmxor %vm588, 1
    %vm720 = vmand %vm704, %vm656
    %vm721 = vmand %vm705, %vm657
    %vm722 = vmand %vm706, %vm658
    %vm723 = vmand %vm707, %vm659
    %vm724 = vmand %vm708, %vm660
    %vm725 = vmand %vm709, %vm661
    %vm726 = vmand %vm710, %vm662
    %vm727 = vmand %vm711, %vm663
    %vm728 = vmand %vm712, %vm664
    %vm729 = vmand %vm713, %vm665
    %vm730 = vmand %vm714, %vm666
    %vm731 = vmand %vm715, %vm667
    %vm732 = vmand %vm716, %vm668
    %vm733 = vmand %vm717, %vm669
    %vm734 = vmand %vm718, %vm670
    %vm735 = vmand %vm719, %vm671
    %v736 = vsel %vm720, %v488, 1e+30
    %v737 = vsel %vm721, %v489, 1e+30
    %v738 = vsel %vm722, %v490, 1e+30
    %v739 = vsel %vm723, %v491, 1e+30
    %v740 = vsel %vm724, %v492, 1e+30
    %v741 = vsel %vm725, %v493, 1e+30
    %v742 = vsel %vm726, %v494, 1e+30
    %v743 = vsel %vm727, %v495, 1e+30
    %v744 = vsel %vm728, %v496, 1e+30
    %v745 = vsel %vm729, %v497, 1e+30
    %v746 = vsel %vm730, %v498, 1e+30
    %v747 = vsel %vm731, %v499, 1e+30
    %v748 = vsel %vm732, %v500, 1e+30
    %v749 = vsel %vm733, %v501, 1e+30
    %v750 = vsel %vm734, %v502, 1e+30
    %v751 = vsel %vm735, %v503, 1e+30
    %p752 = scmp.eq.s32.totalorder 0, 0
    // Predicated region
    $region50: #{tpu_custom_call.1} parent=1 // pred_check
      %p753 = pneg %p752
    $region51: #{tpu_custom_call.1} parent=1 // pred_check_branch
      %755 = sbr.rel (%p753) target = $region53
    $region52: #{tpu_custom_call.1} parent=1 // pred_region
      %756 = vst [vmem:[#allocation2] sm:$0xff] -1e+30
      %757 = vst [vmem:[#allocation2 + $0x8] sm:$0xff] -1e+30
      %758 = vst [vmem:[#allocation2 + $0x10] sm:$0xff] -1e+30
      %759 = vst [vmem:[#allocation2 + $0x18] sm:$0xff] -1e+30
      %760 = vst [vmem:[#allocation2 + $0x20] sm:$0xff] -1e+30
      %761 = vst [vmem:[#allocation2 + $0x28] sm:$0xff] -1e+30
      %762 = vst [vmem:[#allocation2 + $0x30] sm:$0xff] -1e+30
      %763 = vst [vmem:[#allocation2 + $0x38] sm:$0xff] -1e+30
      %764 = vst [vmem:[#allocation2 + $0x40] sm:$0xff] -1e+30
      %765 = vst [vmem:[#allocation2 + $0x48] sm:$0xff] -1e+30
      %766 = vst [vmem:[#allocation2 + $0x50] sm:$0xff] -1e+30
      %767 = vst [vmem:[#allocation2 + $0x58] sm:$0xff] -1e+30
      %768 = vst [vmem:[#allocation2 + $0x60] sm:$0xff] -1e+30
      %769 = vst [vmem:[#allocation2 + $0x68] sm:$0xff] -1e+30
      %770 = vst [vmem:[#allocation2 + $0x70] sm:$0xff] -1e+30
      %771 = vst [vmem:[#allocation2 + $0x78] sm:$0xff] -1e+30
      %772 = vst [vmem:[#allocation3] sm:$0xff] 1e+30
      %773 = vst [vmem:[#allocation3 + $0x8] sm:$0xff] 1e+30
      %774 = vst [vmem:[#allocation3 + $0x10] sm:$0xff] 1e+30
      %775 = vst [vmem:[#allocation3 + $0x18] sm:$0xff] 1e+30
      %776 = vst [vmem:[#allocation3 + $0x20] sm:$0xff] 1e+30
      %777 = vst [vmem:[#allocation3 + $0x28] sm:$0xff] 1e+30
      %778 = vst [vmem:[#allocation3 + $0x30] sm:$0xff] 1e+30
      %779 = vst [vmem:[#allocation3 + $0x38] sm:$0xff] 1e+30
      %780 = vst [vmem:[#allocation3 + $0x40] sm:$0xff] 1e+30
      %781 = vst [vmem:[#allocation3 + $0x48] sm:$0xff] 1e+30
      %782 = vst [vmem:[#allocation3 + $0x50] sm:$0xff] 1e+30
      %783 = vst [vmem:[#allocation3 + $0x58] sm:$0xff] 1e+30
      %784 = vst [vmem:[#allocation3 + $0x60] sm:$0xff] 1e+30
      %785 = vst [vmem:[#allocation3 + $0x68] sm:$0xff] 1e+30
      %786 = vst [vmem:[#allocation3 + $0x70] sm:$0xff] 1e+30
      %787 = vst [vmem:[#allocation3 + $0x78] sm:$0xff] 1e+30
    $region53: #{tpu_custom_call.1} parent=1 // pred_fallthru
      _
    %v788 = vld [vmem:[#allocation2] sm:$0xff]
    %v789 = vld [vmem:[#allocation2 + $0x8] sm:$0xff]
    %v790 = vld [vmem:[#allocation2 + $0x10] sm:$0xff]
    %v791 = vld [vmem:[#allocation2 + $0x18] sm:$0xff]
    %v792 = vld [vmem:[#allocation2 + $0x20] sm:$0xff]
    %v793 = vld [vmem:[#allocation2 + $0x28] sm:$0xff]
    %v794 = vld [vmem:[#allocation2 + $0x30] sm:$0xff]
    %v795 = vld [vmem:[#allocation2 + $0x38] sm:$0xff]
    %v796 = vld [vmem:[#allocation2 + $0x40] sm:$0xff]
    %v797 = vld [vmem:[#allocation2 + $0x48] sm:$0xff]
    %v798 = vld [vmem:[#allocation2 + $0x50] sm:$0xff]
    %v799 = vld [vmem:[#allocation2 + $0x58] sm:$0xff]
    %v800 = vld [vmem:[#allocation2 + $0x60] sm:$0xff]
    %v801 = vld [vmem:[#allocation2 + $0x68] sm:$0xff]
    %v802 = vld [vmem:[#allocation2 + $0x70] sm:$0xff]
    %v803 = vld [vmem:[#allocation2 + $0x78] sm:$0xff]
    %v804 = vmax.f32 %v788, %v688
    %v805 = vmax.f32 %v789, %v689
    %v806 = vmax.f32 %v790, %v690
    %v807 = vmax.f32 %v791, %v691
    %v808 = vmax.f32 %v792, %v692
    %v809 = vmax.f32 %v793, %v693
    %v810 = vmax.f32 %v794, %v694
    %v811 = vmax.f32 %v795, %v695
    %v812 = vmax.f32 %v796, %v696
    %v813 = vmax.f32 %v797, %v697
    %v814 = vmax.f32 %v798, %v698
    %v815 = vmax.f32 %v799, %v699
    %v816 = vmax.f32 %v800, %v700
    %v817 = vmax.f32 %v801, %v701
    %v818 = vmax.f32 %v802, %v702
    %v819 = vmax.f32 %v803, %v703
    %820 = vst [vmem:[#allocation2] sm:$0xff] %v804
    %821 = vst [vmem:[#allocation2 + $0x8] sm:$0xff] %v805
    %822 = vst [vmem:[#allocation2 + $0x10] sm:$0xff] %v806
    %823 = vst [vmem:[#allocation2 + $0x18] sm:$0xff] %v807
    %824 = vst [vmem:[#allocation2 + $0x20] sm:$0xff] %v808
    %825 = vst [vmem:[#allocation2 + $0x28] sm:$0xff] %v809
    %826 = vst [vmem:[#allocation2 + $0x30] sm:$0xff] %v810
    %827 = vst [vmem:[#allocation2 + $0x38] sm:$0xff] %v811
    %828 = vst [vmem:[#allocation2 + $0x40] sm:$0xff] %v812
    %829 = vst [vmem:[#allocation2 + $0x48] sm:$0xff] %v813
    %830 = vst [vmem:[#allocation2 + $0x50] sm:$0xff] %v814
    %831 = vst [vmem:[#allocation2 + $0x58] sm:$0xff] %v815
    %832 = vst [vmem:[#allocation2 + $0x60] sm:$0xff] %v816
    %833 = vst [vmem:[#allocation2 + $0x68] sm:$0xff] %v817
    %834 = vst [vmem:[#allocation2 + $0x70] sm:$0xff] %v818
    %835 = vst [vmem:[#allocation2 + $0x78] sm:$0xff] %v819
    %v836 = vld [vmem:[#allocation3] sm:$0xff]
    %v837 = vld [vmem:[#allocation3 + $0x8] sm:$0xff]
    %v838 = vld [vmem:[#allocation3 + $0x10] sm:$0xff]
    %v839 = vld [vmem:[#allocation3 + $0x18] sm:$0xff]
    %v840 = vld [vmem:[#allocation3 + $0x20] sm:$0xff]
    %v841 = vld [vmem:[#allocation3 + $0x28] sm:$0xff]
    %v842 = vld [vmem:[#allocation3 + $0x30] sm:$0xff]
    %v843 = vld [vmem:[#allocation3 + $0x38] sm:$0xff]
    %v844 = vld [vmem:[#allocation3 + $0x40] sm:$0xff]
    %v845 = vld [vmem:[#allocation3 + $0x48] sm:$0xff]
    %v846 = vld [vmem:[#allocation3 + $0x50] sm:$0xff]
    %v847 = vld [vmem:[#allocation3 + $0x58] sm:$0xff]
    %v848 = vld [vmem:[#allocation3 + $0x60] sm:$0xff]
    %v849 = vld [vmem:[#allocation3 + $0x68] sm:$0xff]
    %v850 = vld [vmem:[#allocation3 + $0x70] sm:$0xff]
    %v851 = vld [vmem:[#allocation3 + $0x78] sm:$0xff]
    %v852 = vmin.f32 %v836, %v736
    %v853 = vmin.f32 %v837, %v737
    %v854 = vmin.f32 %v838, %v738
    %v855 = vmin.f32 %v839, %v739
    %v856 = vmin.f32 %v840, %v740
    %v857 = vmin.f32 %v841, %v741
    %v858 = vmin.f32 %v842, %v742
    %v859 = vmin.f32 %v843, %v743
    %v860 = vmin.f32 %v844, %v744
    %v861 = vmin.f32 %v845, %v745
    %v862 = vmin.f32 %v846, %v746
    %v863 = vmin.f32 %v847, %v747
    %v864 = vmin.f32 %v848, %v748
    %v865 = vmin.f32 %v849, %v749
    %v866 = vmin.f32 %v850, %v750
    %v867 = vmin.f32 %v851, %v751
    %868 = vst [vmem:[#allocation3] sm:$0xff] %v852
    %869 = vst [vmem:[#allocation3 + $0x8] sm:$0xff] %v853
    %870 = vst [vmem:[#allocation3 + $0x10] sm:$0xff] %v854
    %871 = vst [vmem:[#allocation3 + $0x18] sm:$0xff] %v855
    %872 = vst [vmem:[#allocation3 + $0x20] sm:$0xff] %v856
    %873 = vst [vmem:[#allocation3 + $0x28] sm:$0xff] %v857
    %874 = vst [vmem:[#allocation3 + $0x30] sm:$0xff] %v858
    %875 = vst [vmem:[#allocation3 + $0x38] sm:$0xff] %v859
    %876 = vst [vmem:[#allocation3 + $0x40] sm:$0xff] %v860
    %877 = vst [vmem:[#allocation3 + $0x48] sm:$0xff] %v861
    %878 = vst [vmem:[#allocation3 + $0x50] sm:$0xff] %v862
    %879 = vst [vmem:[#allocation3 + $0x58] sm:$0xff] %v863
    %880 = vst [vmem:[#allocation3 + $0x60] sm:$0xff] %v864
    %881 = vst [vmem:[#allocation3 + $0x68] sm:$0xff] %v865
    %882 = vst [vmem:[#allocation3 + $0x70] sm:$0xff] %v866
    %883 = vst [vmem:[#allocation3 + $0x78] sm:$0xff] %v867
    // Predicated region
    $region54: #{tpu_custom_call.1} parent=1 // pred_check
      %p884 = pneg %p752
    $region55: #{tpu_custom_call.1} parent=1 // pred_check_branch
      %886 = sbr.rel (%p884) target = $region57
    $region56: #{tpu_custom_call.1} parent=1 // pred_region
      %v887 = vld [vmem:[#allocation9] sm:$0x1]
      %v888 = vld [vmem:[#allocation2] sm:$0xff]
      %v889 = vld [vmem:[#allocation2 + $0x8] sm:$0xff]
      %v890 = vld [vmem:[#allocation2 + $0x10] sm:$0xff]
      %v891 = vld [vmem:[#allocation2 + $0x18] sm:$0xff]
      %v892 = vld [vmem:[#allocation2 + $0x20] sm:$0xff]
      %v893 = vld [vmem:[#allocation2 + $0x28] sm:$0xff]
      %v894 = vld [vmem:[#allocation2 + $0x30] sm:$0xff]
      %v895 = vld [vmem:[#allocation2 + $0x38] sm:$0xff]
      %v896 = vld [vmem:[#allocation2 + $0x40] sm:$0xff]
      %v897 = vld [vmem:[#allocation2 + $0x48] sm:$0xff]
      %v898 = vld [vmem:[#allocation2 + $0x50] sm:$0xff]
      %v899 = vld [vmem:[#allocation2 + $0x58] sm:$0xff]
      %v900 = vld [vmem:[#allocation2 + $0x60] sm:$0xff]
      %v901 = vld [vmem:[#allocation2 + $0x68] sm:$0xff]
      %v902 = vld [vmem:[#allocation2 + $0x70] sm:$0xff]
      %v903 = vld [vmem:[#allocation2 + $0x78] sm:$0xff]
      %v904 = vmax.f32 %v888, %v892
      %v905 = vmax.f32 %v889, %v893
      %v906 = vmax.f32 %v890, %v894
      %v907 = vmax.f32 %v891, %v895
      %v908 = vmax.f32 %v904, %v896
      %v909 = vmax.f32 %v905, %v897
      %v910 = vmax.f32 %v906, %v898
      %v911 = vmax.f32 %v907, %v899
      %v912 = vmax.f32 %v908, %v900
      %v913 = vmax.f32 %v909, %v901
      %v914 = vmax.f32 %v910, %v902
      %v915 = vmax.f32 %v911, %v903
      %v916 = vmax.f32 %v912, %v913
      %v917 = vmax.f32 %v914, %v915
      %v918 = vmax.f32 %v916, %v917
      %v919 = vrot.slane %v918, 4
      %v920 = vmax.f32 %v918, %v919
      %v921 = vrot.slane %v920, 2
      %v922 = vmax.f32 %v920, %v921
      %v923 = vrot.slane %v922, 1
      %v924 = vmax.f32 %v922, %v923
      %v925 = vadd.f32 %v924, %v887
      %v926 = vld [vmem:[#allocation3] sm:$0xff]
      %v927 = vld [vmem:[#allocation3 + $0x8] sm:$0xff]
      %v928 = vld [vmem:[#allocation3 + $0x10] sm:$0xff]
      %v929 = vld [vmem:[#allocation3 + $0x18] sm:$0xff]
      %v930 = vld [vmem:[#allocation3 + $0x20] sm:$0xff]
      %v931 = vld [vmem:[#allocation3 + $0x28] sm:$0xff]
      %v932 = vld [vmem:[#allocation3 + $0x30] sm:$0xff]
      %v933 = vld [vmem:[#allocation3 + $0x38] sm:$0xff]
      %v934 = vld [vmem:[#allocation3 + $0x40] sm:$0xff]
      %v935 = vld [vmem:[#allocation3 + $0x48] sm:$0xff]
      %v936 = vld [vmem:[#allocation3 + $0x50] sm:$0xff]
      %v937 = vld [vmem:[#allocation3 + $0x58] sm:$0xff]
      %v938 = vld [vmem:[#allocation3 + $0x60] sm:$0xff]
      %v939 = vld [vmem:[#allocation3 + $0x68] sm:$0xff]
      %v940 = vld [vmem:[#allocation3 + $0x70] sm:$0xff]
      %v941 = vld [vmem:[#allocation3 + $0x78] sm:$0xff]
      %v942 = vmin.f32 %v926, %v930
      %v943 = vmin.f32 %v927, %v931
      %v944 = vmin.f32 %v928, %v932
      %v945 = vmin.f32 %v929, %v933
      %v946 = vmin.f32 %v942, %v934
      %v947 = vmin.f32 %v943, %v935
      %v948 = vmin.f32 %v944, %v936
      %v949 = vmin.f32 %v945, %v937
      %v950 = vmin.f32 %v946, %v938
      %v951 = vmin.f32 %v947, %v939
      %v952 = vmin.f32 %v948, %v940
      %v953 = vmin.f32 %v949, %v941
      %v954 = vmin.f32 %v950, %v951
      %v955 = vmin.f32 %v952, %v953
      %v956 = vmin.f32 %v954, %v955
      %v957 = vrot.slane %v956, 4
      %v958 = vmin.f32 %v956, %v957
      %v959 = vrot.slane %v958, 2
      %v960 = vmin.f32 %v958, %v959
      %v961 = vrot.slane %v960, 1
      %v962 = vmin.f32 %v960, %v961
      %v963 = vadd.f32 %v962, %v887
      %v964 = vmax.f32 %v925, 1e-12
      %v965 = vrsqrt.pop %v964
      %v966 = vmul.f32 %v964, %v965
      %vm967 = vcmp.eq.f32.partialorder %v964, inf
      %v968 = vsel %vm967, %v964, %v966
      %vm969 = vcmp.eq.f32.partialorder %v964, 0.0
      %v970 = vand.u32 %v964, 2147483648
      %v971 = vsel %vm969, %v970, %v968
      %v972 = vmax.f32 %v963, 1e-12
      %v973 = vrsqrt.pop %v972
      %v974 = vmul.f32 %v972, %v973
      %vm975 = vcmp.eq.f32.partialorder %v972, inf
      %v976 = vsel %vm975, %v972, %v974
      %vm977 = vcmp.eq.f32.partialorder %v972, 0.0
      %v978 = vand.u32 %v972, 2147483648
      %v979 = vsel %vm977, %v978, %v976
      %v980 = vsub.f32 %v971, %v979
      %v981 = vadd.f32 %v980, 0.3
      %v982 = vmax.f32 %v981, 0.0
      %s983 = smul.u32 0, 128
      %v984 = vlaneseq
      %v985 = vand.u32 %v984, 127
      %v986 = vstv %s983
      %v987 = vadd.s32 %v986, %v985
      %vm988 = vcmp.lt.s32.totalorder %v987, 8
      %v989 = vsel %vm988, %v982, 0.0
      %990 = vst [vmem:[#allocation15] sm:$0x1] %v989
    $region57: #{tpu_custom_call.1} parent=1 // pred_fallthru
      _
    // Predicated region
    $region58: #{tpu_custom_call.1} parent=1 // pred_check
      _
    $region59: #{tpu_custom_call.1} parent=1 // pred_check_branch
      %992 = sbr.rel (0) target = $region61
    $region60: #{tpu_custom_call.1} parent=1 // pred_region
      %s994 = ssub.s32 16, 16
      %995 = vsyncadd [#allocation6], %s994
      %s997 = sshll.u32 [#allocation15], 4
      %s998 = int_to_ptr.vmem [resolvable:$true] %s997
      %1000 = dma.vmem_to_hbm [thread:$0]  %s998, 16, %s6, [#allocation6]
    $region61: #{tpu_custom_call.1} parent=1 // pred_fallthru
      _
    // Predicated region
    $region62: #{tpu_custom_call.1} parent=1 // pred_check
      _
    $region63: #{tpu_custom_call.1} parent=1 // pred_check_branch
      %1002 = sbr.rel (0) target = $region65
    $region64: #{tpu_custom_call.1} parent=1 // pred_region
      %1003 = dma.done [#allocation6], 16
    $region65: #{tpu_custom_call.1} parent=1 // pred_fallthru
      _
    %1004 = vsyncpa [#allocation5], 1
    %1005 = vsyncpa [#allocation8], 1
    %1006 = vsyncpa [#allocation11], 1
    %1007 = vsyncpa [#allocation14], 1
    %1008 = vsyncpa [#allocation6], 1

</llo_original>
